<compile_context>
chip_gen: v6e
topology: v6e:2x2x1
jax: 0.10.0
libtpu: 0.0.40
codegen_flags: <defaults>
</compile_context>

<pallas_src>
import functools

import jax
import jax.numpy as jnp
from jax.experimental import pallas as pl
from jax.experimental.pallas import tpu as pltpu

ALPHA = 0.25
GAMMA = 2.0

_LANE = 128
_SUBLANE = 8
# ~2 MiB of f32 logits per block. With the label block and double buffering the
# pipelined working set is <= ~8 MiB -> fits v5e/v6e/v7x default scoped VMEM.
_MAX_BLOCK_ELEMS = 512 * 1024


def _round_up(a, b):
    return -(-a // b) * b


def _focal_term(x, y, alpha, gamma):
    """Per-element focal term: alpha_t * (1 - pt)**gamma * BCEWithLogits(x, y)."""
    x = x.astype(jnp.float32)
    y = y.astype(jnp.float32)
    is_pos = y == 1.0
    a = jnp.where(is_pos, alpha, 1.0 - alpha)

    # One exp shared across sigmoid, pt and the BCE term:
    #   e = exp(-|x|);  r = 1/(1+e)
    #   sigmoid(x)     = r    (x >= 0) else e*r
    #   1 - sigmoid(x) = e*r  (x >= 0) else r
    #   BCE(x, y)      = max(x, 0) - x*y + log1p(e)      (stable form)
    e = jnp.exp(-jnp.abs(x))
    t = 1.0 + e
    r = pl.reciprocal(t, approx=True)
    r = r * (2.0 - t * r)            # one Newton step -> ~f32 accuracy (VPU only)
    er = e * r
    nonneg = x >= 0.0
    p = jnp.where(nonneg, r, er)             # sigmoid(x)
    one_minus_p = jnp.where(nonneg, er, r)   # 1 - sigmoid(x)
    u = jnp.where(is_pos, one_minus_p, p)    # 1 - pt

    ce = jnp.maximum(x, 0.0) - x * y + jnp.log1p(e)

    g = float(gamma)
    if g == 2.0:
        mod = u * u                  # VPU; avoids jnp.power -> exp(g*log(u)) on EUP
    elif g.is_integer() and 0.0 <= g <= 4.0:
        mod = jnp.ones_like(u)
        for _ in range(int(g)):
            mod = mod * u
    else:
        mod = jnp.power(u, g)        # generic (non-integer) gamma fallback
    return a * mod * ce


def _rowsum_kernel_1d(x_ref, y_ref, out_ref, *, alpha, gamma, d_valid, block_d):
    """Whole reduction dim in one block: grid over row tiles only."""
    term = _focal_term(x_ref[...], y_ref[...], alpha, gamma)
    if d_valid != block_d:  # zero contribution of padded columns
        col = jax.lax.broadcasted_iota(jnp.int32, term.shape, 1)
        term = jnp.where(col < d_valid, term, 0.0)
    out_ref[...] = term.sum(axis=1, keepdims=True)


def _rowsum_kernel_2d(x_ref, y_ref, out_ref, acc_ref, *, alpha, gamma,
                      d_valid, block_d, d_padded):
    """Reduction dim split across grid axis 1 ('arbitrary'); lane-partial acc."""
    j = pl.program_id(1)

    @pl.when(j == 0)
    def _():
        acc_ref[...] = jnp.zeros_like(acc_ref)

    term = _focal_term(x_ref[...], y_ref[...], alpha, gamma)

    if d_padded != d_valid:  # zero contribution of padded columns (last D block)
        col = j * block_d + jax.lax.broadcasted_iota(jnp.int32, term.shape, 1)
        term = jnp.where(col < d_valid, term, 0.0)

    # Keep 128-lane partial sums (plain VPU adds of lane-aligned slices); the
    # cross-lane (XLU) reduce + narrow store happen only once, at the end.
    partial = term[:, 0:_LANE]
    for c in range(1, block_d // _LANE):
        partial = partial + term[:, c * _LANE:(c + 1) * _LANE]
    acc_ref[...] += partial

    @pl.when(j == pl.num_programs(1) - 1)
    def _():
        out_ref[...] = acc_ref[...].sum(axis=1, keepdims=True)


def _focal_row_sums(x, y, alpha, gamma, tile_n=None, tile_d=None):
    """x, y: (M, D). Returns f32 (M,) = per-row sum of the focal term."""
    M, D = x.shape

    # ---- tile selection -----------------------------------------------------
    if tile_d is None:
        tile_d = D if D * _SUBLANE <= _MAX_BLOCK_ELEMS else 16 * _LANE  # 2048
    if tile_d >= D:
        tile_d = D                       # whole reduction dim in one block
    else:
        tile_d = _round_up(tile_d, _LANE)
        if tile_d >= D:
            tile_d = D
    if tile_n is None:
        tile_n = max(_SUBLANE, min(512, _MAX_BLOCK_ELEMS // max(tile_d, 1)))
    tile_n = _round_up(max(int(tile_n), 1), _SUBLANE)
    tile_n = min(tile_n, _round_up(M, _SUBLANE))

    D_pad = _round_up(D, tile_d)
    M_pad = _round_up(M, tile_n)

    if (M_pad, D_pad) != (M, D):
        # zero-pad to tile multiples; padded columns are masked in-kernel and
        # padded rows are dropped below, so they contribute nothing.
        x = jnp.pad(x, ((0, M_pad - M), (0, D_pad - D)))
        y = jnp.pad(y, ((0, M_pad - M), (0, D_pad - D)))

    grid_n = M_pad // tile_n
    grid_d = D_pad // tile_d
    out_shape = jax.ShapeDtypeStruct((M_pad, 1), jnp.float32)

    if grid_d == 1:
        kernel = functools.partial(_rowsum_kernel_1d, alpha=float(alpha),
                                   gamma=float(gamma), d_valid=D, block_d=tile_d)
        row_sums = pl.pallas_call(
            kernel,
            out_shape=out_shape,
            grid_spec=pltpu.PrefetchScalarGridSpec(
                num_scalar_prefetch=0,
                grid=(grid_n,),
                in_specs=[pl.BlockSpec((tile_n, tile_d), lambda i: (i, 0)),
                          pl.BlockSpec((tile_n, tile_d), lambda i: (i, 0))],
                out_specs=pl.BlockSpec((tile_n, 1), lambda i: (i, 0)),
            ),
            compiler_params=pltpu.CompilerParams(
                dimension_semantics=("parallel",)),
        )(x, y)
    else:
        kernel = functools.partial(_rowsum_kernel_2d, alpha=float(alpha),
                                   gamma=float(gamma), d_valid=D,
                                   block_d=tile_d, d_padded=D_pad)
        row_sums = pl.pallas_call(
            kernel,
            out_shape=out_shape,
            grid_spec=pltpu.PrefetchScalarGridSpec(
                num_scalar_prefetch=0,
                grid=(grid_n, grid_d),
                in_specs=[pl.BlockSpec((tile_n, tile_d), lambda i, j: (i, j)),
                          pl.BlockSpec((tile_n, tile_d), lambda i, j: (i, j))],
                out_specs=pl.BlockSpec((tile_n, 1), lambda i, j: (i, 0)),
                scratch_shapes=[pltpu.VMEM((tile_n, _LANE), jnp.float32)],
            ),
            compiler_params=pltpu.CompilerParams(
                dimension_semantics=("parallel", "arbitrary")),
        )(x, y)

    return row_sums[:M, 0]


def focal_loss(logits, label, *, alpha=ALPHA, gamma=GAMMA, reduction="mean",
               tile_n=None, tile_d=None):
    """Focal loss matching the PyTorch module. logits/label: (N, ...) same shape."""
    assert logits.shape == label.shape, (logits.shape, label.shape)
    assert logits.ndim >= 2, "need at least (N, C)"
    shape = logits.shape
    N, C = shape[0], shape[1]

    if reduction == "none" and logits.ndim > 2:
        # loss.sum(dim=1) keeps (N, *rest): group so dim 1 is the row-reduced axis.
        x = jnp.moveaxis(logits, 1, -1).reshape(-1, C)
        y = jnp.moveaxis(label, 1, -1).reshape(-1, C)
    else:
        # mean / sum only need the grand total: flatten all trailing dims (no transpose).
        x = logits.reshape(N, -1)
        y = label.reshape(N, -1)

    row_sums = _focal_row_sums(x, y, alpha, gamma, tile_n, tile_d)

    if reduction == "mean":
        # PyTorch: loss.sum(dim=1).mean() == total / (numel / C)
        return row_sums.sum() / (logits.size // C)
    if reduction == "sum":
        return row_sums.sum()
    if logits.ndim > 2:
        return row_sums.reshape((N,) + shape[2:])
    return row_sums


def _focal_loss_ref(logits, label, alpha=ALPHA, gamma=GAMMA, reduction="mean"):
    """Pure-JAX reference of the PyTorch module."""
    x = logits.astype(jnp.float32)
    y = label.astype(jnp.float32)
    a = jnp.where(y == 1.0, alpha, 1.0 - alpha)
    p = jax.nn.sigmoid(x)
    pt = jnp.where(y == 1.0, p, 1.0 - p)
    ce = jnp.maximum(x, 0.0) - x * y + jnp.log1p(jnp.exp(-jnp.abs(x)))
    loss = (a * (1.0 - pt) ** gamma * ce).sum(axis=1)
    if reduction == "mean":
        return loss.mean()
    if reduction == "sum":
        return loss.sum()
    return loss


if __name__ == "__main__":
    key = jax.random.PRNGKey(0)
    k1, k2 = jax.random.split(key)
    N, C, H, W = 2, 4, 16, 16
    logits = jax.random.normal(k1, (N, C, H, W), dtype=jnp.float32) * 2.0
    label = (jax.random.uniform(k2, (N, C, H, W)) > 0.7).astype(jnp.float32)

    ref = jax.block_until_ready(_focal_loss_ref(logits, label))

    # Default tiling: whole reduction dim in one block -> 1-D all-parallel grid.
    out = jax.block_until_ready(focal_loss(logits, label))
    assert jnp.allclose(out, ref, rtol=1e-4, atol=1e-5), (out, ref)

    # Force the 2-D reduction path (split D) to exercise the lane-partial accumulator.
    out2 = jax.block_until_ready(focal_loss(logits, label, tile_d=128))
    assert jnp.allclose(out2, ref, rtol=1e-4, atol=1e-5), (out2, ref)

    print("KERNEL_OK")
</pallas_src>

<mosaic_0001>
module attributes {stable_mosaic.version = 11 : i64} {
  func.func @_rowsum_kernel_1d(%arg0: i32, %arg1: memref<8x1024xf32, #tpu.memory_space<vmem>>, %arg2: memref<8x1024xf32, #tpu.memory_space<vmem>>, %arg3: memref<8x1xf32, #tpu.memory_space<vmem>>) attributes {dimension_semantics = [#tpu.dimension_semantics<parallel>], iteration_bounds = array<i64: 1>, scalar_prefetch = 0 : i64, scratch_operands = 0 : i64, tpu.core_type = #tpu.core_type<tc>, window_params = [{transform_indices = @transform_0, window_bounds = array<i64: 8, 1024>}, {transform_indices = @transform_1, window_bounds = array<i64: 8, 1024>}, {transform_indices = @transform_2, window_bounds = array<i64: 8, 1>}]} {
    %c0 = arith.constant 0 : index
    %c0_0 = arith.constant 0 : index
    %0 = vector.load %arg1[%c0, %c0_0] : memref<8x1024xf32, #tpu.memory_space<vmem>>, vector<8x1024xf32>
    %c0_1 = arith.constant 0 : index
    %c0_2 = arith.constant 0 : index
    %1 = vector.load %arg2[%c0_1, %c0_2] : memref<8x1024xf32, #tpu.memory_space<vmem>>, vector<8x1024xf32>
    %cst = arith.constant 1.000000e+00 : f32
    %2 = vector.broadcast %cst : f32 to vector<8x1024xf32>
    %3 = arith.cmpf oeq, %1, %2 : vector<8x1024xf32>
    %cst_3 = arith.constant 2.500000e-01 : f32
    %cst_4 = arith.constant 7.500000e-01 : f32
    %4 = vector.broadcast %cst_3 : f32 to vector<8x1024xf32>
    %5 = vector.broadcast %cst_4 : f32 to vector<8x1024xf32>
    %6 = arith.select %3, %4, %5 : vector<8x1024xi1>, vector<8x1024xf32>
    %7 = math.absf %0 : vector<8x1024xf32>
    %cst_5 = arith.constant 0.000000e+00 : f32
    %8 = vector.broadcast %cst_5 : f32 to vector<8x1024xf32>
    %9 = arith.subf %8, %7 : vector<8x1024xf32>
    %10 = math.exp %9 : vector<8x1024xf32>
    %cst_6 = arith.constant 1.000000e+00 : f32
    %11 = vector.broadcast %cst_6 : f32 to vector<8x1024xf32>
    %12 = arith.addf %11, %10 : vector<8x1024xf32>
    %13 = tpu.reciprocal %12 {approx = true} : vector<8x1024xf32> -> vector<8x1024xf32>
    %14 = arith.mulf %12, %13 : vector<8x1024xf32>
    %cst_7 = arith.constant 2.000000e+00 : f32
    %15 = vector.broadcast %cst_7 : f32 to vector<8x1024xf32>
    %16 = arith.subf %15, %14 : vector<8x1024xf32>
    %17 = arith.mulf %13, %16 : vector<8x1024xf32>
    %18 = arith.mulf %10, %17 : vector<8x1024xf32>
    %cst_8 = arith.constant 0.000000e+00 : f32
    %19 = vector.broadcast %cst_8 : f32 to vector<8x1024xf32>
    %20 = arith.cmpf oge, %0, %19 : vector<8x1024xf32>
    %21 = arith.select %20, %17, %18 : vector<8x1024xi1>, vector<8x1024xf32>
    %22 = arith.select %20, %18, %17 : vector<8x1024xi1>, vector<8x1024xf32>
    %23 = arith.select %3, %22, %21 : vector<8x1024xi1>, vector<8x1024xf32>
    %cst_9 = arith.constant 0.000000e+00 : f32
    %24 = vector.broadcast %cst_9 : f32 to vector<8x1024xf32>
    %25 = arith.maximumf %0, %24 : vector<8x1024xf32>
    %26 = arith.mulf %0, %1 : vector<8x1024xf32>
    %27 = arith.subf %25, %26 : vector<8x1024xf32>
    %28 = math.log1p %10 : vector<8x1024xf32>
    %29 = arith.addf %27, %28 : vector<8x1024xf32>
    %30 = arith.mulf %23, %23 : vector<8x1024xf32>
    %31 = arith.mulf %6, %30 : vector<8x1024xf32>
    %32 = arith.mulf %31, %29 : vector<8x1024xf32>
    %cst_10 = arith.constant dense<0.000000e+00> : vector<8xf32>
    %33 = vector.multi_reduction <add>, %32, %cst_10 [1] : vector<8x1024xf32> to vector<8xf32>
    %34 = vector.shape_cast %33 : vector<8xf32> to vector<8x1xf32>
    %c0_11 = arith.constant 0 : index
    %c0_12 = arith.constant 0 : index
    %35 = vector.load %arg3[%c0_11, %c0_12] : memref<8x1xf32, #tpu.memory_space<vmem>>, vector<8x1xf32>
    tpu.vector_store %arg3[%c0_11, %c0_12], %34 {strides = array<i32>} : memref<8x1xf32, #tpu.memory_space<vmem>>, vector<8x1xf32>,
    return
  }
  func.func @transform_0(%arg0: i32) -> (i32, i32) {
    %c0_i32 = arith.constant 0 : i32
    %c0_i32_0 = arith.constant 0 : i32
    return %arg0, %c0_i32 : i32, i32
  }
  func.func @transform_1(%arg0: i32) -> (i32, i32) {
    %c0_i32 = arith.constant 0 : i32
    %c0_i32_0 = arith.constant 0 : i32
    return %arg0, %c0_i32 : i32, i32
  }
  func.func @transform_2(%arg0: i32) -> (i32, i32) {
    %c0_i32 = arith.constant 0 : i32
    %c0_i32_0 = arith.constant 0 : i32
    return %arg0, %c0_i32 : i32, i32
  }
}

</mosaic_0001>

<llo_original>
// kernel: tpu_custom_call.1
$region0: #{tpu_custom_call.1}
  #allocation0 [shape = 'u32[]', space=smem, size = 0x4, offset = 0x4, fixed_abs, tag = 'smem constant byte address 0x4 - core index']
  #allocation1 [shape = 'u32[144,128]{1,0:T(1,128)}', space=vmem, size = 0x12000, scoped, tag = 'internal scratch']
  %s0 = inlined_call_operand.hbm [shape: f32[8,1024], index: 0, kind: input, shape index: {}]
  %s1 = inlined_call_operand.hbm [shape: f32[8,1024], index: 1, kind: input, shape index: {}]
  %s2 = inlined_call_operand.vmem [shape: f32[8,1], index: 2, kind: output, shape index: {}]
  %s3 = sld [smem:[#allocation0]]
  $region26: #{tpu_custom_call.1} parent=0
    _
  %s5 = ssub.s32 1, %s3
  %s6 = scalar_select 0, %s5, %s3
  $region1: #{tpu_custom_call.1} parent=0
    #allocation2 [shape = 'u8[32768]{0}', space=vmem, size = 0x8000, scoped, tag = 'input window, operand 0, single buffered']
    #allocation3 [shape = 's32[1]{0}', space=sflag, size = 0x4, scoped, tag = 'scoped memory for tpu_custom_call.1']
    #allocation4 [shape = 'u8[32768]{0}', space=vmem, size = 0x8000, scoped, tag = 'input window, operand 1, single buffered']
    #allocation5 [shape = 's32[1]{0}', space=sflag, size = 0x4, scoped, tag = 'scoped memory for tpu_custom_call.1']
    %7 = vsyncpa [#allocation3], 0
    %8 = vsyncpa [#allocation5], 0
    // Predicated region
    $region2: #{tpu_custom_call.1} parent=1 // pred_check
      _
    $region3: #{tpu_custom_call.1} parent=1 // pred_check_branch
      %10 = sbr.rel (0) target = $region5
    $region4: #{tpu_custom_call.1} parent=1 // pred_region
      %s12 = ssub.s32 1024, 1024
      %13 = vsyncadd [#allocation3], %s12
      %s15 = sshll.u32 [#allocation2], 4
      %s16 = int_to_ptr.vmem [resolvable:$true] %s15
      %18 = dma.hbm_to_vmem [thread:$0]  %s0, 1024, %s16, [#allocation3]
    $region5: #{tpu_custom_call.1} parent=1 // pred_fallthru
      _
    // Predicated region
    $region6: #{tpu_custom_call.1} parent=1 // pred_check
      _
    $region7: #{tpu_custom_call.1} parent=1 // pred_check_branch
      %20 = sbr.rel (0) target = $region9
    $region8: #{tpu_custom_call.1} parent=1 // pred_region
      %s22 = ssub.s32 1024, 1024
      %23 = vsyncadd [#allocation5], %s22
      %s25 = sshll.u32 [#allocation4], 4
      %s26 = int_to_ptr.vmem [resolvable:$true] %s25
      %28 = dma.hbm_to_vmem [thread:$0]  %s1, 1024, %s26, [#allocation5]
    $region9: #{tpu_custom_call.1} parent=1 // pred_fallthru
      _
    // Predicated region
    $region10: #{tpu_custom_call.1} parent=1 // pred_check
      _
    $region11: #{tpu_custom_call.1} parent=1 // pred_check_branch
      %30 = sbr.rel (0) target = $region13
    $region12: #{tpu_custom_call.1} parent=1 // pred_region
      %31 = dma.done [#allocation3], 1024
    $region13: #{tpu_custom_call.1} parent=1 // pred_fallthru
      _
    // Predicated region
    $region14: #{tpu_custom_call.1} parent=1 // pred_check
      _
    $region15: #{tpu_custom_call.1} parent=1 // pred_check_branch
      %33 = sbr.rel (0) target = $region17
    $region16: #{tpu_custom_call.1} parent=1 // pred_region
      %34 = dma.done [#allocation5], 1024
    $region17: #{tpu_custom_call.1} parent=1 // pred_fallthru
      _
    %v35 = vld [vmem:[#allocation2] sm:$0xff]
    %v36 = vld [vmem:[#allocation2 + $0x8] sm:$0xff]
    %v37 = vld [vmem:[#allocation2 + $0x10] sm:$0xff]
    %v38 = vld [vmem:[#allocation2 + $0x18] sm:$0xff]
    %v39 = vld [vmem:[#allocation2 + $0x20] sm:$0xff]
    %v40 = vld [vmem:[#allocation2 + $0x28] sm:$0xff]
    %v41 = vld [vmem:[#allocation2 + $0x30] sm:$0xff]
    %v42 = vld [vmem:[#allocation2 + $0x38] sm:$0xff]
    %v43 = vld [vmem:[#allocation4] sm:$0xff]
    %v44 = vld [vmem:[#allocation4 + $0x8] sm:$0xff]
    %v45 = vld [vmem:[#allocation4 + $0x10] sm:$0xff]
    %v46 = vld [vmem:[#allocation4 + $0x18] sm:$0xff]
    %v47 = vld [vmem:[#allocation4 + $0x20] sm:$0xff]
    %v48 = vld [vmem:[#allocation4 + $0x28] sm:$0xff]
    %v49 = vld [vmem:[#allocation4 + $0x30] sm:$0xff]
    %v50 = vld [vmem:[#allocation4 + $0x38] sm:$0xff]
    %vm51 = vcmp.eq.f32.partialorder %v43, 1.0
    %vm52 = vcmp.eq.f32.partialorder %v44, 1.0
    %vm53 = vcmp.eq.f32.partialorder %v45, 1.0
    %vm54 = vcmp.eq.f32.partialorder %v46, 1.0
    %vm55 = vcmp.eq.f32.partialorder %v47, 1.0
    %vm56 = vcmp.eq.f32.partialorder %v48, 1.0
    %vm57 = vcmp.eq.f32.partialorder %v49, 1.0
    %vm58 = vcmp.eq.f32.partialorder %v50, 1.0
    %v59 = vsel %vm51, 0.25, 0.75
    %v60 = vsel %vm52, 0.25, 0.75
    %v61 = vsel %vm53, 0.25, 0.75
    %v62 = vsel %vm54, 0.25, 0.75
    %v63 = vsel %vm55, 0.25, 0.75
    %v64 = vsel %vm56, 0.25, 0.75
    %v65 = vsel %vm57, 0.25, 0.75
    %v66 = vsel %vm58, 0.25, 0.75
    %v67 = vand.u32 2147483647, %v35
    %v68 = vand.u32 2147483647, %v36
    %v69 = vand.u32 2147483647, %v37
    %v70 = vand.u32 2147483647, %v38
    %v71 = vand.u32 2147483647, %v39
    %v72 = vand.u32 2147483647, %v40
    %v73 = vand.u32 2147483647, %v41
    %v74 = vand.u32 2147483647, %v42
    %v75 = vsub.f32 0.0, %v67
    %v76 = vsub.f32 0.0, %v68
    %v77 = vsub.f32 0.0, %v69
    %v78 = vsub.f32 0.0, %v70
    %v79 = vsub.f32 0.0, %v71
    %v80 = vsub.f32 0.0, %v72
    %v81 = vsub.f32 0.0, %v73
    %v82 = vsub.f32 0.0, %v74
    %v83 = vmul.f32 %v75, 1.442695
    %v84 = vpow.pop %v83
    %v85 = vmul.f32 %v76, 1.442695
    %v86 = vpow.pop %v85
    %v87 = vmul.f32 %v77, 1.442695
    %v88 = vpow.pop %v87
    %v89 = vmul.f32 %v78, 1.442695
    %v90 = vpow.pop %v89
    %v91 = vmul.f32 %v79, 1.442695
    %v92 = vpow.pop %v91
    %v93 = vmul.f32 %v80, 1.442695
    %v94 = vpow.pop %v93
    %v95 = vmul.f32 %v81, 1.442695
    %v96 = vpow.pop %v95
    %v97 = vmul.f32 %v82, 1.442695
    %v98 = vpow.pop %v97
    %v99 = vadd.f32 %v84, 1.0
    %v100 = vadd.f32 %v86, 1.0
    %v101 = vadd.f32 %v88, 1.0
    %v102 = vadd.f32 %v90, 1.0
    %v103 = vadd.f32 %v92, 1.0
    %v104 = vadd.f32 %v94, 1.0
    %v105 = vadd.f32 %v96, 1.0
    %v106 = vadd.f32 %v98, 1.0
    %v107 = vrcp.pop %v99
    %v108 = vrcp.pop %v100
    %v109 = vrcp.pop %v101
    %v110 = vrcp.pop %v102
    %v111 = vrcp.pop %v103
    %v112 = vrcp.pop %v104
    %v113 = vrcp.pop %v105
    %v114 = vrcp.pop %v106
    %v115 = vmul.f32 %v99, %v107
    %v116 = vmul.f32 %v100, %v108
    %v117 = vmul.f32 %v101, %v109
    %v118 = vmul.f32 %v102, %v110
    %v119 = vmul.f32 %v103, %v111
    %v120 = vmul.f32 %v104, %v112
    %v121 = vmul.f32 %v105, %v113
    %v122 = vmul.f32 %v106, %v114
    %v123 = vsub.f32 2.0, %v115
    %v124 = vsub.f32 2.0, %v116
    %v125 = vsub.f32 2.0, %v117
    %v126 = vsub.f32 2.0, %v118
    %v127 = vsub.f32 2.0, %v119
    %v128 = vsub.f32 2.0, %v120
    %v129 = vsub.f32 2.0, %v121
    %v130 = vsub.f32 2.0, %v122
    %v131 = vmul.f32 %v107, %v123
    %v132 = vmul.f32 %v108, %v124
    %v133 = vmul.f32 %v109, %v125
    %v134 = vmul.f32 %v110, %v126
    %v135 = vmul.f32 %v111, %v127
    %v136 = vmul.f32 %v112, %v128
    %v137 = vmul.f32 %v113, %v129
    %v138 = vmul.f32 %v114, %v130
    %v139 = vmul.f32 %v84, %v131
    %v140 = vmul.f32 %v86, %v132
    %v141 = vmul.f32 %v88, %v133
    %v142 = vmul.f32 %v90, %v134
    %v143 = vmul.f32 %v92, %v135
    %v144 = vmul.f32 %v94, %v136
    %v145 = vmul.f32 %v96, %v137
    %v146 = vmul.f32 %v98, %v138
    %vm147 = vcmp.ge.f32.partialorder %v35, 0.0
    %vm148 = vcmp.ge.f32.partialorder %v36, 0.0
    %vm149 = vcmp.ge.f32.partialorder %v37, 0.0
    %vm150 = vcmp.ge.f32.partialorder %v38, 0.0
    %vm151 = vcmp.ge.f32.partialorder %v39, 0.0
    %vm152 = vcmp.ge.f32.partialorder %v40, 0.0
    %vm153 = vcmp.ge.f32.partialorder %v41, 0.0
    %vm154 = vcmp.ge.f32.partialorder %v42, 0.0
    %v155 = vsel %vm147, %v131, %v139
    %v156 = vsel %vm148, %v132, %v140
    %v157 = vsel %vm149, %v133, %v141
    %v158 = vsel %vm150, %v134, %v142
    %v159 = vsel %vm151, %v135, %v143
    %v160 = vsel %vm152, %v136, %v144
    %v161 = vsel %vm153, %v137, %v145
    %v162 = vsel %vm154, %v138, %v146
    %v163 = vsel %vm147, %v139, %v131
    %v164 = vsel %vm148, %v140, %v132
    %v165 = vsel %vm149, %v141, %v133
    %v166 = vsel %vm150, %v142, %v134
    %v167 = vsel %vm151, %v143, %v135
    %v168 = vsel %vm152, %v144, %v136
    %v169 = vsel %vm153, %v145, %v137
    %v170 = vsel %vm154, %v146, %v138
    %v171 = vsel %vm51, %v163, %v155
    %v172 = vsel %vm52, %v164, %v156
    %v173 = vsel %vm53, %v165, %v157
    %v174 = vsel %vm54, %v166, %v158
    %v175 = vsel %vm55, %v167, %v159
    %v176 = vsel %vm56, %v168, %v160
    %v177 = vsel %vm57, %v169, %v161
    %v178 = vsel %vm58, %v170, %v162
    %v179 = vmax.f32 %v35, 0.0
    %v180 = vmax.f32 %v36, 0.0
    %v181 = vmax.f32 %v37, 0.0
    %v182 = vmax.f32 %v38, 0.0
    %v183 = vmax.f32 %v39, 0.0
    %v184 = vmax.f32 %v40, 0.0
    %v185 = vmax.f32 %v41, 0.0
    %v186 = vmax.f32 %v42, 0.0
    %v187 = vmul.f32 %v35, %v43
    %v188 = vmul.f32 %v36, %v44
    %v189 = vmul.f32 %v37, %v45
    %v190 = vmul.f32 %v38, %v46
    %v191 = vmul.f32 %v39, %v47
    %v192 = vmul.f32 %v40, %v48
    %v193 = vmul.f32 %v41, %v49
    %v194 = vmul.f32 %v42, %v50
    %v195 = vsub.f32 %v179, %v187
    %v196 = vsub.f32 %v180, %v188
    %v197 = vsub.f32 %v181, %v189
    %v198 = vsub.f32 %v182, %v190
    %v199 = vsub.f32 %v183, %v191
    %v200 = vsub.f32 %v184, %v192
    %v201 = vsub.f32 %v185, %v193
    %v202 = vsub.f32 %v186, %v194
    %v203 = vadd.f32 %v84, 1.0
    %v204 = vlog2.pop %v203
    %v205 = vmul.f32 %v204, 0.6931472
    %v206 = vmul.f32 -0.5, %v84
    %v207 = vadd.f32 %v206, 1.0
    %v208 = vmul.f32 %v207, %v84
    %v209 = vand.u32 2147483647, %v84
    %vm210 = vcmp.lt.f32.partialorder %v209, 0.0004427343
    %v211 = vsel %vm210, %v208, %v205
    %v212 = vadd.f32 %v86, 1.0
    %v213 = vlog2.pop %v212
    %v214 = vmul.f32 %v213, 0.6931472
    %v215 = vmul.f32 -0.5, %v86
    %v216 = vadd.f32 %v215, 1.0
    %v217 = vmul.f32 %v216, %v86
    %v218 = vand.u32 2147483647, %v86
    %vm219 = vcmp.lt.f32.partialorder %v218, 0.0004427343
    %v220 = vsel %vm219, %v217, %v214
    %v221 = vadd.f32 %v88, 1.0
    %v222 = vlog2.pop %v221
    %v223 = vmul.f32 %v222, 0.6931472
    %v224 = vmul.f32 -0.5, %v88
    %v225 = vadd.f32 %v224, 1.0
    %v226 = vmul.f32 %v225, %v88
    %v227 = vand.u32 2147483647, %v88
    %vm228 = vcmp.lt.f32.partialorder %v227, 0.0004427343
    %v229 = vsel %vm228, %v226, %v223
    %v230 = vadd.f32 %v90, 1.0
    %v231 = vlog2.pop %v230
    %v232 = vmul.f32 %v231, 0.6931472
    %v233 = vmul.f32 -0.5, %v90
    %v234 = vadd.f32 %v233, 1.0
    %v235 = vmul.f32 %v234, %v90
    %v236 = vand.u32 2147483647, %v90
    %vm237 = vcmp.lt.f32.partialorder %v236, 0.0004427343
    %v238 = vsel %vm237, %v235, %v232
    %v239 = vadd.f32 %v92, 1.0
    %v240 = vlog2.pop %v239
    %v241 = vmul.f32 %v240, 0.6931472
    %v242 = vmul.f32 -0.5, %v92
    %v243 = vadd.f32 %v242, 1.0
    %v244 = vmul.f32 %v243, %v92
    %v245 = vand.u32 2147483647, %v92
    %vm246 = vcmp.lt.f32.partialorder %v245, 0.0004427343
    %v247 = vsel %vm246, %v244, %v241
    %v248 = vadd.f32 %v94, 1.0
    %v249 = vlog2.pop %v248
    %v250 = vmul.f32 %v249, 0.6931472
    %v251 = vmul.f32 -0.5, %v94
    %v252 = vadd.f32 %v251, 1.0
    %v253 = vmul.f32 %v252, %v94
    %v254 = vand.u32 2147483647, %v94
    %vm255 = vcmp.lt.f32.partialorder %v254, 0.0004427343
    %v256 = vsel %vm255, %v253, %v250
    %v257 = vadd.f32 %v96, 1.0
    %v258 = vlog2.pop %v257
    %v259 = vmul.f32 %v258, 0.6931472
    %v260 = vmul.f32 -0.5, %v96
    %v261 = vadd.f32 %v260, 1.0
    %v262 = vmul.f32 %v261, %v96
    %v263 = vand.u32 2147483647, %v96
    %vm264 = vcmp.lt.f32.partialorder %v263, 0.0004427343
    %v265 = vsel %vm264, %v262, %v259
    %v266 = vadd.f32 %v98, 1.0
    %v267 = vlog2.pop %v266
    %v268 = vmul.f32 %v267, 0.6931472
    %v269 = vmul.f32 -0.5, %v98
    %v270 = vadd.f32 %v269, 1.0
    %v271 = vmul.f32 %v270, %v98
    %v272 = vand.u32 2147483647, %v98
    %vm273 = vcmp.lt.f32.partialorder %v272, 0.0004427343
    %v274 = vsel %vm273, %v271, %v268
    %v275 = vadd.f32 %v195, %v211
    %v276 = vadd.f32 %v196, %v220
    %v277 = vadd.f32 %v197, %v229
    %v278 = vadd.f32 %v198, %v238
    %v279 = vadd.f32 %v199, %v247
    %v280 = vadd.f32 %v200, %v256
    %v281 = vadd.f32 %v201, %v265
    %v282 = vadd.f32 %v202, %v274
    %v283 = vmul.f32 %v171, %v171
    %v284 = vmul.f32 %v172, %v172
    %v285 = vmul.f32 %v173, %v173
    %v286 = vmul.f32 %v174, %v174
    %v287 = vmul.f32 %v175, %v175
    %v288 = vmul.f32 %v176, %v176
    %v289 = vmul.f32 %v177, %v177
    %v290 = vmul.f32 %v178, %v178
    %v291 = vmul.f32 %v59, %v283
    %v292 = vmul.f32 %v60, %v284
    %v293 = vmul.f32 %v61, %v285
    %v294 = vmul.f32 %v62, %v286
    %v295 = vmul.f32 %v63, %v287
    %v296 = vmul.f32 %v64, %v288
    %v297 = vmul.f32 %v65, %v289
    %v298 = vmul.f32 %v66, %v290
    %v299 = vmul.f32 %v291, %v275
    %v300 = vmul.f32 %v292, %v276
    %v301 = vmul.f32 %v293, %v277
    %v302 = vmul.f32 %v294, %v278
    %v303 = vmul.f32 %v295, %v279
    %v304 = vmul.f32 %v296, %v280
    %v305 = vmul.f32 %v297, %v281
    %v306 = vmul.f32 %v298, %v282
    %v307 = vadd.f32 %v299, %v300
    %v308 = vadd.f32 %v307, %v301
    %v309 = vadd.f32 %v308, %v302
    %v310 = vadd.f32 %v309, %v303
    %v311 = vadd.f32 %v310, %v304
    %v312 = vadd.f32 %v311, %v305
    %v313 = vadd.f32 %v312, %v306
    %314 = vadd.xlane.f32.xlu0 %v313
    %v315 = vpop.xlane.xlu0 %314
    %vm316 = vcmask 7168
    %317 = vst.msk [vmem:[%s2] sm:$0xff] %vm316, %v315
    // Predicated region
    $region18: #{tpu_custom_call.1} parent=1 // pred_check
      _
    $region19: #{tpu_custom_call.1} parent=1 // pred_check_branch
      %319 = sbr.rel (0) target = $region21
    $region20: #{tpu_custom_call.1} parent=1 // pred_region
      _
    $region21: #{tpu_custom_call.1} parent=1 // pred_fallthru
      _
    // Predicated region
    $region22: #{tpu_custom_call.1} parent=1 // pred_check
      _
    $region23: #{tpu_custom_call.1} parent=1 // pred_check_branch
      %321 = sbr.rel (0) target = $region25
    $region24: #{tpu_custom_call.1} parent=1 // pred_region
      _
    $region25: #{tpu_custom_call.1} parent=1 // pred_fallthru
      _
    %322 = vsyncpa [#allocation3], 1
    %323 = vsyncpa [#allocation5], 1

</llo_original>
